<compile_context>
chip_gen: v5e
topology: v5e:2x2
jax: 0.10.0
libtpu: 0.0.40
codegen_flags: <defaults>
</compile_context>

<pallas_src>
import functools

import numpy as np
import jax
import jax.numpy as jnp
from jax import lax
from jax.experimental import pallas as pl
from jax.experimental.pallas import tpu as pltpu


def _layer_kernel(stu_ref, tea_ref, out_ref, *, S, TR, inv_thresh, needs_valid):
    """One (n, row_tile) step: channel softmax, masked squared-diff partials."""
    stu = stu_ref[0].astype(jnp.float32)   # (C, TR, 128)
    tea = tea_ref[0].astype(jnp.float32)   # (C, TR, 128)

    # Channel softmax numerators/denominators. The channel axis is axis 0 of
    # the tile, so these reductions are cheap cross-vreg VPU ops (no XLU).
    stu_e = jnp.exp(stu - jnp.max(stu, axis=0, keepdims=True))
    tea_e = jnp.exp(tea - jnp.max(tea, axis=0, keepdims=True))
    stu_s = jnp.sum(stu_e, axis=0)         # (TR, 128)
    tea_s = jnp.sum(tea_e, axis=0)         # (TR, 128)

    # EUP reciprocals (idle slot) + one per-pixel Newton step for f32 accuracy;
    # replaces 2*C full-tile divides with 2*C vmuls.
    inv_s = pl.reciprocal(stu_s, approx=True)
    inv_t = pl.reciprocal(tea_s, approx=True)
    inv_s = inv_s * (2.0 - stu_s * inv_s)
    inv_t = inv_t * (2.0 - tea_s * inv_t)

    d = stu_e * inv_s[None] - tea_e * inv_t[None]
    sq_sum = jnp.sum(d * d, axis=0)        # (TR, 128): sum_c (stu_p - tea_p)^2

    # conf_tea = max_c softmax(tea) = exp(0)/tea_s = 1/tea_s, so
    # (conf_tea > thresh)  <=>  (tea_s < 1/thresh).  No vmax over C needed.
    mask = tea_s < jnp.float32(inv_thresh)

    if needs_valid:
        # Ragged spatial size and/or partial last row-tile: exclude padded /
        # unspecified pixels from both reductions.  Applied to (TR,128) results
        # only (not the (C,TR,128) inputs) — O(1) per spatial vreg.
        row = pl.program_id(1) * TR + lax.broadcasted_iota(jnp.int32, (TR, 128), 0)
        lane = lax.broadcasted_iota(jnp.int32, (TR, 128), 1)
        mask = mask & ((row * 128 + lane) < S)

    # jnp.where (not a multiply) so NaN/Inf from garbage edge rows is quashed.
    loss_part = jnp.sum(jnp.where(mask, sq_sum, 0.0))
    cnt_part = jnp.sum(mask.astype(jnp.float32))

    # One lane-dense (8,128) tile per grid step: row 0 = loss partial,
    # row 1 = count partial, rest zero.  Tiny, parallel-safe writeback.
    r = lax.broadcasted_iota(jnp.int32, (8, 128), 0)
    out_ref[0, 0] = jnp.where(r == 0, loss_part,
                              jnp.where(r == 1, cnt_part, jnp.float32(0.0)))


def _vmem_caps():
    """Generation-aware (budget for tile sizing, scoped-VMEM limit) in bytes."""
    try:
        cap = int(pltpu.get_tpu_info().vmem_capacity_bytes)
    except Exception:
        cap = 64 * 1024 * 1024   # conservative (v7x per-TC) fallback
    return cap // 4, cap // 2


def _choose_tile_rows(C, R, in_itemsize, budget_bytes):
    """Largest row-tile (rows of 128 lanes) whose working set fits the budget."""
    # Per resident row: 2 inputs x 2 pipeline buffers (input dtype) + ~5 f32
    # (C, TR, 128) temporaries (exp numerators / fused diff; no p materialized).
    per_row = C * 128 * (4 * in_itemsize + 5 * 4)
    tr = budget_bytes // max(per_row, 1)
    if tr >= R:
        return R
    return min(max(8, (tr // 8) * 8), R)


def _layer_loss(stu_logits, tea_logits, confidence_thresh, *, tile_rows=None):
    """Pallas layer_loss on logits: returns (mean masked loss, mask count)."""
    assert stu_logits.shape == tea_logits.shape
    N, C, H, W = stu_logits.shape
    S = H * W
    R = pl.cdiv(S, 128)
    pad = R * 128 - S
    in_itemsize = jnp.dtype(stu_logits.dtype).itemsize

    def to_lane_dense(x):
        x = x.reshape(N, C, S)
        if pad:
            x = jnp.pad(x, ((0, 0), (0, 0), (0, pad)))   # zeros: softmax-safe
        return x.reshape(N, C, R, 128)

    stu = to_lane_dense(stu_logits)
    tea = to_lane_dense(tea_logits)

    budget, vmem_limit = _vmem_caps()
    if tile_rows is None:
        TR = _choose_tile_rows(C, R, in_itemsize, budget)
    else:
        TR = min(int(tile_rows), R)
        if TR != R and TR % 8:
            TR = max(8, (TR // 8) * 8)
    num_r = pl.cdiv(R, TR)

    # v7x: guarantee >= 2 grid steps so both TensorCores get work.
    if N * num_r < 2 and R > 8:
        TR = max(8, (((R + 1) // 2) // 8) * 8)
        num_r = pl.cdiv(R, TR)

    needs_valid = (pad != 0) or (R % TR != 0)
    kernel = functools.partial(_layer_kernel, S=S, TR=TR,
                               inv_thresh=1.0 / float(confidence_thresh),
                               needs_valid=needs_valid)

    in_spec = pl.BlockSpec((1, C, TR, 128), lambda n, r: (n, 0, r, 0))
    out_spec = pl.BlockSpec((1, 1, 8, 128), lambda n, r: (n, r, 0, 0))

    cost = pl.CostEstimate(
        flops=12 * N * C * S,
        transcendentals=2 * N * C * S,
        bytes_accessed=2 * N * C * S * in_itemsize + N * num_r * 8 * 128 * 4)

    partials = pl.pallas_call(
        kernel,
        out_shape=jax.ShapeDtypeStruct((N, num_r, 8, 128), jnp.float32),
        grid=(N, num_r),
        in_specs=[in_spec, in_spec],
        out_specs=out_spec,
        compiler_params=pltpu.CompilerParams(
            dimension_semantics=("parallel", "parallel"),
            vmem_limit_bytes=vmem_limit),
        cost_estimate=cost,
    )(stu, tea)

    loss_sum = jnp.sum(partials[:, :, 0, 0])
    count = jnp.sum(partials[:, :, 1, 0])
    loss = loss_sum / jnp.float32(N * C * H * W)   # (internal_loss*mask).mean()
    return loss, count


def internal_consistency_loss_forward(internal_weight, target_1_score,
                                      target_2_score,
                                      confidence_thresh=0.96837722,
                                      start_from=1, loss_type='bce'):
    """Pallas implementation of Internal_consistency_loss.forward."""
    # TODO(synk): loss_type='iic' (mutual-information loss) is not implemented;
    # for 'bce'/'ce'/'ce_' the original module's dangling `else:` overwrites the
    # loss with (stu - tea)**2, which is exactly what the kernel computes.
    del loss_type
    if internal_weight is None:
        internal_weight = [0.0, 0.0, 0.0]
    assert len(internal_weight) == len(target_1_score) - start_from

    total_loss = jnp.zeros((), jnp.float32)
    total_count = jnp.zeros((), jnp.float32)
    for i in range(start_from, len(target_1_score)):
        loss_i, count_i = _layer_loss(target_1_score[i], target_2_score[i],
                                      confidence_thresh)
        # Weight indexing [i - 1] kept identical to the original module (it is
        # only consistent for start_from == 1, matching the PyTorch spec).
        total_loss = total_loss + jnp.float32(internal_weight[i - 1]) * loss_i
        total_count = total_count + count_i
    return [total_loss[None], total_count[None]]


def _ref_layer(t1, t2, thresh):
    """Pure-JAX reference for one layer (softmax + masked squared diff)."""
    stu = jax.nn.softmax(t1.astype(jnp.float32), axis=1)
    tea = jax.nn.softmax(t2.astype(jnp.float32), axis=1)
    d = stu - tea
    conf = jnp.max(tea, axis=1)
    mask = (conf > thresh).astype(jnp.float32)
    return (d * d * mask[:, None]).mean(), mask.sum()


if __name__ == "__main__":
    key = jax.random.PRNGKey(0)
    # Small multi-layer score pyramid (layer 0 is skipped since start_from=1).
    shapes = [(2, 4, 8, 128),    # layer 0 (unused)
              (2, 4, 32, 128),   # layer 1: lane-dense, multi-row
              (2, 4, 16, 96),    # layer 2: W=96 but H*W % 128 == 0
              (2, 4, 10, 25)]    # layer 3: ragged spatial size (zero-pad path)
    keys = jax.random.split(key, 2 * len(shapes))
    t1 = [5.0 * jax.random.normal(keys[2 * i], s, jnp.float32)
          for i, s in enumerate(shapes)]
    t2 = [5.0 * jax.random.normal(keys[2 * i + 1], s, jnp.float32)
          for i, s in enumerate(shapes)]
    internal_weight = [0.7, 0.3, 1.2]
    thresh = 0.96837722

    out = internal_consistency_loss_forward(internal_weight, t1, t2,
                                            confidence_thresh=thresh)
    out = jax.block_until_ready(out)
    loss, count = out

    # --- validate against the pure-JAX reference (full forward) ---
    r_loss = jnp.zeros((), jnp.float32)
    r_count = jnp.zeros((), jnp.float32)
    for i in range(1, len(shapes)):
        l, c = _ref_layer(t1[i], t2[i], thresh)
        r_loss = r_loss + jnp.float32(internal_weight[i - 1]) * l
        r_count = r_count + c
    np.testing.assert_allclose(np.asarray(loss[0]), np.asarray(r_loss),
                               rtol=1e-4, atol=1e-6)
    np.testing.assert_allclose(np.asarray(count[0]), np.asarray(r_count),
                               rtol=0, atol=0.5)
    assert float(count[0]) > 0.0

    # --- additionally exercise multi-tile, partial-edge-tile and ragged paths ---
    for (a, b, tr_force) in [(t1[1], t2[1], 8),     # R=32: 4 full row-tiles
                             (t1[2], t2[2], 8),     # R=12: partial last tile
                             (t2[3], t1[3], None)]: # S=250: zero-padded lanes
        l_k, c_k = jax.block_until_ready(_layer_loss(a, b, thresh,
                                                     tile_rows=tr_force))
        l_r, c_r = _ref_layer(a, b, thresh)
        np.testing.assert_allclose(np.asarray(l_k), np.asarray(l_r),
                                   rtol=1e-4, atol=1e-6)
        np.testing.assert_allclose(np.asarray(c_k), np.asarray(c_r),
                                   rtol=0, atol=0.5)

    print("KERNEL_OK")
</pallas_src>

<mosaic_0001>
module attributes {stable_mosaic.version = 11 : i64} {
  func.func @_layer_kernel(%arg0: i32, %arg1: i32, %arg2: memref<1x4x32x128xf32, #tpu.memory_space<vmem>>, %arg3: memref<1x4x32x128xf32, #tpu.memory_space<vmem>>, %arg4: memref<1x1x8x128xf32, #tpu.memory_space<vmem>>) attributes {dimension_semantics = [#tpu.dimension_semantics<parallel>, #tpu.dimension_semantics<parallel>], iteration_bounds = array<i64: 2, 1>, scalar_prefetch = 0 : i64, scratch_operands = 0 : i64, tpu.core_type = #tpu.core_type<tc>, window_params = [{transform_indices = @transform_0, window_bounds = array<i64: 1, 4, 32, 128>}, {transform_indices = @transform_1, window_bounds = array<i64: 1, 4, 32, 128>}, {transform_indices = @transform_2, window_bounds = array<i64: 1, 1, 8, 128>}]} {
    %c0 = arith.constant 0 : index
    %c0_0 = arith.constant 0 : index
    %c0_1 = arith.constant 0 : index
    %c0_2 = arith.constant 0 : index
    %0 = vector.load %arg2[%c0, %c0_0, %c0_1, %c0_2] : memref<1x4x32x128xf32, #tpu.memory_space<vmem>>, vector<1x4x32x128xf32>
    %1 = vector.shape_cast %0 : vector<1x4x32x128xf32> to vector<4x32x128xf32>
    %c0_3 = arith.constant 0 : index
    %c0_4 = arith.constant 0 : index
    %c0_5 = arith.constant 0 : index
    %c0_6 = arith.constant 0 : index
    %2 = vector.load %arg3[%c0_3, %c0_4, %c0_5, %c0_6] : memref<1x4x32x128xf32, #tpu.memory_space<vmem>>, vector<1x4x32x128xf32>
    %3 = vector.shape_cast %2 : vector<1x4x32x128xf32> to vector<4x32x128xf32>
    %cst = arith.constant dense<0xFF800000> : vector<32x128xf32>
    %4 = vector.multi_reduction <maximumf>, %1, %cst [0] : vector<4x32x128xf32> to vector<32x128xf32>
    %5 = vector.shape_cast %4 : vector<32x128xf32> to vector<1x32x128xf32>
    %6 = vector.broadcast %5 : vector<1x32x128xf32> to vector<4x32x128xf32>
    %7 = arith.subf %1, %6 : vector<4x32x128xf32>
    %8 = math.exp %7 : vector<4x32x128xf32>
    %cst_7 = arith.constant dense<0xFF800000> : vector<32x128xf32>
    %9 = vector.multi_reduction <maximumf>, %3, %cst_7 [0] : vector<4x32x128xf32> to vector<32x128xf32>
    %10 = vector.shape_cast %9 : vector<32x128xf32> to vector<1x32x128xf32>
    %11 = vector.broadcast %10 : vector<1x32x128xf32> to vector<4x32x128xf32>
    %12 = arith.subf %3, %11 : vector<4x32x128xf32>
    %13 = math.exp %12 : vector<4x32x128xf32>
    %cst_8 = arith.constant dense<0.000000e+00> : vector<32x128xf32>
    %14 = vector.multi_reduction <add>, %8, %cst_8 [0] : vector<4x32x128xf32> to vector<32x128xf32>
    %cst_9 = arith.constant dense<0.000000e+00> : vector<32x128xf32>
    %15 = vector.multi_reduction <add>, %13, %cst_9 [0] : vector<4x32x128xf32> to vector<32x128xf32>
    %16 = tpu.reciprocal %14 {approx = true} : vector<32x128xf32> -> vector<32x128xf32>
    %17 = tpu.reciprocal %15 {approx = true} : vector<32x128xf32> -> vector<32x128xf32>
    %18 = arith.mulf %14, %16 : vector<32x128xf32>
    %cst_10 = arith.constant 2.000000e+00 : f32
    %19 = vector.broadcast %cst_10 : f32 to vector<32x128xf32>
    %20 = arith.subf %19, %18 : vector<32x128xf32>
    %21 = arith.mulf %16, %20 : vector<32x128xf32>
    %22 = arith.mulf %15, %17 : vector<32x128xf32>
    %cst_11 = arith.constant 2.000000e+00 : f32
    %23 = vector.broadcast %cst_11 : f32 to vector<32x128xf32>
    %24 = arith.subf %23, %22 : vector<32x128xf32>
    %25 = arith.mulf %17, %24 : vector<32x128xf32>
    %26 = vector.shape_cast %21 : vector<32x128xf32> to vector<1x32x128xf32>
    %27 = vector.broadcast %26 : vector<1x32x128xf32> to vector<4x32x128xf32>
    %28 = arith.mulf %8, %27 : vector<4x32x128xf32>
    %29 = vector.shape_cast %25 : vector<32x128xf32> to vector<1x32x128xf32>
    %30 = vector.broadcast %29 : vector<1x32x128xf32> to vector<4x32x128xf32>
    %31 = arith.mulf %13, %30 : vector<4x32x128xf32>
    %32 = arith.subf %28, %31 : vector<4x32x128xf32>
    %33 = arith.mulf %32, %32 : vector<4x32x128xf32>
    %cst_12 = arith.constant dense<0.000000e+00> : vector<32x128xf32>
    %34 = vector.multi_reduction <add>, %33, %cst_12 [0] : vector<4x32x128xf32> to vector<32x128xf32>
    %cst_13 = arith.constant 1.03265548 : f32
    %35 = vector.broadcast %cst_13 : f32 to vector<32x128xf32>
    %36 = arith.cmpf olt, %15, %35 : vector<32x128xf32>
    %cst_14 = arith.constant 0.000000e+00 : f32
    %37 = vector.broadcast %cst_14 : f32 to vector<32x128xf32>
    %38 = arith.select %36, %34, %37 : vector<32x128xi1>, vector<32x128xf32>
    %39 = vector.shape_cast %38 : vector<32x128xf32> to vector<1x32x128xf32>
    %cst_15 = arith.constant dense<0.000000e+00> : vector<1xf32>
    %40 = vector.multi_reduction <add>, %39, %cst_15 [1, 2] : vector<1x32x128xf32> to vector<1xf32>
    %41 = vector.shape_cast %40 : vector<1xf32> to vector<1x1x1xf32>
    %42 = vector.extract %41[0, 0, 0] : f32 from vector<1x1x1xf32>
    %43 = arith.extui %36 : vector<32x128xi1> to vector<32x128xi32>
    %44 = arith.sitofp %43 : vector<32x128xi32> to vector<32x128xf32>
    %45 = vector.shape_cast %44 : vector<32x128xf32> to vector<1x32x128xf32>
    %cst_16 = arith.constant dense<0.000000e+00> : vector<1xf32>
    %46 = vector.multi_reduction <add>, %45, %cst_16 [1, 2] : vector<1x32x128xf32> to vector<1xf32>
    %47 = vector.shape_cast %46 : vector<1xf32> to vector<1x1x1xf32>
    %48 = vector.extract %47[0, 0, 0] : f32 from vector<1x1x1xf32>
    %49 = tpu.iota {dimensions = array<i32: 0>} : vector<8x128xi32>
    %c0_i32 = arith.constant 0 : i32
    %50 = vector.broadcast %c0_i32 : i32 to vector<8x128xi32>
    %51 = arith.cmpi eq, %49, %50 : vector<8x128xi32>
    %c1_i32 = arith.constant 1 : i32
    %52 = vector.broadcast %c1_i32 : i32 to vector<8x128xi32>
    %53 = arith.cmpi eq, %49, %52 : vector<8x128xi32>
    %cst_17 = arith.constant 0.000000e+00 : f32
    %54 = vector.broadcast %48 : f32 to vector<8x128xf32>
    %55 = vector.broadcast %cst_17 : f32 to vector<8x128xf32>
    %56 = arith.select %53, %54, %55 : vector<8x128xi1>, vector<8x128xf32>
    %57 = vector.broadcast %42 : f32 to vector<8x128xf32>
    %58 = arith.select %51, %57, %56 : vector<8x128xi1>, vector<8x128xf32>
    %c0_18 = arith.constant 0 : index
    %c0_19 = arith.constant 0 : index
    %c0_20 = arith.constant 0 : index
    %c0_21 = arith.constant 0 : index
    %59 = vector.load %arg4[%c0_18, %c0_19, %c0_20, %c0_21] : memref<1x1x8x128xf32, #tpu.memory_space<vmem>>, vector<1x1x8x128xf32>
    %60 = vector.shape_cast %59 : vector<1x1x8x128xf32> to vector<8x128xf32>
    %61 = vector.shape_cast %58 : vector<8x128xf32> to vector<1x1x8x128xf32>
    tpu.vector_store %arg4[%c0_18, %c0_19, %c0_20, %c0_21], %61 {strides = array<i32>} : memref<1x1x8x128xf32, #tpu.memory_space<vmem>>, vector<1x1x8x128xf32>,
    return
  }
  func.func @transform_0(%arg0: i32, %arg1: i32) -> (i32, i32, i32, i32) {
    %c0_i32 = arith.constant 0 : i32
    %c0_i32_0 = arith.constant 0 : i32
    %c0_i32_1 = arith.constant 0 : i32
    return %arg0, %c0_i32, %arg1, %c0_i32_0 : i32, i32, i32, i32
  }
  func.func @transform_1(%arg0: i32, %arg1: i32) -> (i32, i32, i32, i32) {
    %c0_i32 = arith.constant 0 : i32
    %c0_i32_0 = arith.constant 0 : i32
    %c0_i32_1 = arith.constant 0 : i32
    return %arg0, %c0_i32, %arg1, %c0_i32_0 : i32, i32, i32, i32
  }
  func.func @transform_2(%arg0: i32, %arg1: i32) -> (i32, i32, i32, i32) {
    %c0_i32 = arith.constant 0 : i32
    %c0_i32_0 = arith.constant 0 : i32
    %c0_i32_1 = arith.constant 0 : i32
    return %arg0, %arg1, %c0_i32, %c0_i32_0 : i32, i32, i32, i32
  }
}

</mosaic_0001>

<llo_original>
// kernel: tpu_custom_call.1
$region0: #{tpu_custom_call.1}
  #allocation0 [shape = 'u32[]', space=smem, size = 0x4, offset = 0x4, fixed_abs, tag = 'smem constant byte address 0x4 - core index']
  #allocation1 [shape = 'u32[72,128]{1,0:T(1,128)}', space=vmem, size = 0x9000, scoped, tag = 'internal scratch']
  %s0 = inlined_call_operand.hbm [shape: f32[2,4,32,128], index: 0, kind: input, shape index: {}]
  %s1 = inlined_call_operand.hbm [shape: f32[2,4,32,128], index: 1, kind: input, shape index: {}]
  %s2 = inlined_call_operand.hbm [shape: f32[2,1,8,128], index: 2, kind: output, shape index: {}]
  %s3 = sld [smem:[#allocation0]]
  $region49: #{tpu_custom_call.1} parent=0
    _
  %s5 = ssub.s32 1, %s3
  %s6 = scalar_select 0, %s5, %s3
  $region1: #{tpu_custom_call.1} parent=0
    #allocation2 [shape = 'u8[131072]{0}', space=vmem, size = 0x20000, scoped, tag = 'input window, operand 0']
    #allocation3 [shape = 's32[2]{0}', space=sflag, size = 0x8, scoped, tag = 'scoped memory for tpu_custom_call.1']
    #allocation4 [shape = 's32[2]{0}', space=sflag, size = 0x8, scoped, tag = 'scoped memory for tpu_custom_call.1']
    #allocation5 [shape = 'u8[131072]{0}', space=vmem, size = 0x20000, scoped, tag = 'input window, operand 1']
    #allocation6 [shape = 's32[2]{0}', space=sflag, size = 0x8, scoped, tag = 'scoped memory for tpu_custom_call.1']
    #allocation7 [shape = 'u8[8192]{0}', space=vmem, size = 0x2000, scoped, tag = 'output window, operand 0']
    %7 = vsyncpa [#allocation3], 0
    %s8 = scalar_lea.sflag [#allocation3], 1
    %9 = vsyncpa %s8, 0
    %10 = vsyncpa [#allocation6], 0
    %s11 = scalar_lea.sflag [#allocation6], 1
    %12 = vsyncpa %s11, 0
    %13 = vsyncpa [#allocation4], 0
    %s14 = scalar_lea.sflag [#allocation4], 1
    %15 = vsyncpa %s14, 0
    loop: start=0, step=1, limit=4
    $region2: #{tpu_custom_call.1} parent=1 // loop_pre_header
      _
    $region3: #{tpu_custom_call.1} parent=1 // loop_header
      %s17 = sphi 0, %s21
      %p18 = scmp.ge.s32.totalorder %s17, 4
      %s24 = sphi 0, %s36
      %s25 = sphi 0, %s32
      %s26 = sphi 0, %s24
      %s27 = sphi 0, %s25
      %s28 = sphi 0, %s26
      %s29 = sphi 0, %s27
      %s41 = sphi 0, %s43
      %s44 = sphi 0, %s41
      %s45 = sphi 0, %s44
      %s61 = sphi 0, %s45
      %s69 = sphi 0, %s71
      %s72 = sphi 0, %s69
      %s73 = sphi 0, %s72
      %s89 = sphi 0, %s73
      %s97 = sphi 0, %s99
      %s100 = sphi 0, %s97
      %s101 = sphi 0, %s100
      %s117 = sphi 0, %s101
    $region4: #{tpu_custom_call.1} parent=1 // loop_header_branch
      %20 = sbr.rel (%p18) target = $region8
    $region5: #{tpu_custom_call.1} parent=1 // loop_body
      %s22 = ssub.s32 %s17, 1
      %s23 = ssub.s32 %s17, 2
      %s30 = sadd.s32 1, %s25
      %p31 = scmp.ge.s32.totalorder %s30, 1
      %s32 = scalar_select %p31, 0, %s30
      %s33 = sadd.s32 1, %s24
      %s34 = scalar_select %p31, %s33, %s24
      %p35 = scmp.ge.s32.totalorder %s34, 2
      %s36 = scalar_select %p35, 0, %s34
      %s37 = ssub.s32 %s24, %s36
      %s38 = ssub.s32 %s25, %s32
      %s39 = sor.u32 %s37, %s38
      %p40 = scmp.eq.s32.totalorder %s39, 0
      %s42 = sadd.s32 %s41, 1
      %s43 = scalar_select %p40, %s41, %s42
      %p46 = pneg %p40
      %p47 = scmp.eq.s32.totalorder %s17, 1
      %p48 = por %p46, %p47
      %p49 = scmp.ne.s32.totalorder %s41, %s44
      %p50 = scmp.eq.s32.totalorder %s17, 0
      %p51 = por %p49, %p50
      %p52 = scmp.ne.s32.totalorder %s41, %s44
      %p53 = scmp.eq.s32.totalorder %s22, 1
      %p54 = por %p52, %p53
      %p55 = scmp.ne.s32.totalorder %s44, %s45
      %p56 = scmp.eq.s32.totalorder %s22, 0
      %p57 = por %p55, %p56
      %p58 = scmp.ne.s32.totalorder %s44, %s45
      %p59 = scmp.eq.s32.totalorder %s23, 1
      %p60 = por %p58, %p59
      %p62 = scmp.ne.s32.totalorder %s45, %s61
      %p63 = scmp.eq.s32.totalorder %s23, 0
      %p64 = por %p62, %p63
      %s65 = ssub.s32 %s24, %s36
      %s66 = ssub.s32 %s25, %s32
      %s67 = sor.u32 %s65, %s66
      %p68 = scmp.eq.s32.totalorder %s67, 0
      %s70 = sadd.s32 %s69, 1
      %s71 = scalar_select %p68, %s69, %s70
      %p74 = pneg %p68
      %p75 = scmp.eq.s32.totalorder %s17, 1
      %p76 = por %p74, %p75
      %p77 = scmp.ne.s32.totalorder %s69, %s72
      %p78 = scmp.eq.s32.totalorder %s17, 0
      %p79 = por %p77, %p78
      %p80 = scmp.ne.s32.totalorder %s69, %s72
      %p81 = scmp.eq.s32.totalorder %s22, 1
      %p82 = por %p80, %p81
      %p83 = scmp.ne.s32.totalorder %s72, %s73
      %p84 = scmp.eq.s32.totalorder %s22, 0
      %p85 = por %p83, %p84
      %p86 = scmp.ne.s32.totalorder %s72, %s73
      %p87 = scmp.eq.s32.totalorder %s23, 1
      %p88 = por %p86, %p87
      %p90 = scmp.ne.s32.totalorder %s73, %s89
      %p91 = scmp.eq.s32.totalorder %s23, 0
      %p92 = por %p90, %p91
      %s93 = ssub.s32 %s24, %s36
      %s94 = ssub.s32 %s25, %s32
      %s95 = sor.u32 %s93, %s94
      %p96 = scmp.eq.s32.totalorder %s95, 0
      %s98 = sadd.s32 %s97, 1
      %s99 = scalar_select %p96, %s97, %s98
      %p102 = pneg %p96
      %p103 = scmp.eq.s32.totalorder %s17, 1
      %p104 = por %p102, %p103
      %p105 = scmp.ne.s32.totalorder %s97, %s100
      %p106 = scmp.eq.s32.totalorder %s17, 0
      %p107 = por %p105, %p106
      %p108 = scmp.ne.s32.totalorder %s97, %s100
      %p109 = scmp.eq.s32.totalorder %s22, 1
      %p110 = por %p108, %p109
      %p111 = scmp.ne.s32.totalorder %s100, %s101
      %p112 = scmp.eq.s32.totalorder %s22, 0
      %p113 = por %p111, %p112
      %p114 = scmp.ne.s32.totalorder %s100, %s101
      %p115 = scmp.eq.s32.totalorder %s23, 1
      %p116 = por %p114, %p115
      %p118 = scmp.ne.s32.totalorder %s101, %s117
      %p119 = scmp.eq.s32.totalorder %s23, 0
      %p120 = por %p118, %p119
      %p121 = scmp.le.s32.totalorder 1, %s17
      %p122 = scmp.lt.s32.totalorder %s17, 3
      %p123 = pnand %p121, %p122
      %p124 = pneg %p123
      // Predicated region
      $region9: #{tpu_custom_call.1} parent=5 // pred_check
        _
      $region10: #{tpu_custom_call.1} parent=5 // pred_check_branch
        %126 = sbr.rel (%p123) target = $region12
      $region11: #{tpu_custom_call.1} parent=5 // pred_region
        %s127 = ssub.s32 %s17, 1
      $region12: #{tpu_custom_call.1} parent=5 // pred_fallthru
        _
      %p128 = scmp.lt.s32.totalorder %s17, 2
      // Predicated region
      $region13: #{tpu_custom_call.1} parent=5 // pred_check
        %p129 = pneg %p128
      $region14: #{tpu_custom_call.1} parent=5 // pred_check_branch
        %131 = sbr.rel (%p129) target = $region16
      $region15: #{tpu_custom_call.1} parent=5 // pred_region
        // Predicated region
        $region17: #{tpu_custom_call.1} parent=15 // pred_check
          %p132 = pneg %p51
        $region18: #{tpu_custom_call.1} parent=15 // pred_check_branch
          %134 = sbr.rel (%p132) target = $region20
        $region19: #{tpu_custom_call.1} parent=15 // pred_region
          %s135 = sand.u32 %s41, 1
          %s136 = scalar_lea.sflag [#allocation3], %s135
          %s137 = sand.u32 %s41, 1
          %s138 = smul.addr %s137, 128
          %s139 = scalar_lea.vmem [#allocation2], %s138
          %s140 = smul.u32 4, %s25
          %142 = vsyncadd %s136, 0
          %s143 = smul.addr %s24, 16
          %s144 = sadd.s32 %s140, %s143
          %s145 = smul.addr %s144, 8
          %s146 = scalar_lea.hbm %s0, %s145
          %s147 = sshll.u32 %s146, 4
          %s148 = int_to_ptr.hbm [resolvable:$true] %s147
          %s149 = sshll.u32 %s139, 4
          %s150 = int_to_ptr.vmem [resolvable:$true] %s149
          %155 = dma.hbm_to_vmem [thread:$0]  %s148, 2048, %s150, %s136, 128, 128, 8
        $region20: #{tpu_custom_call.1} parent=15 // pred_fallthru
          _
        // Predicated region
        $region21: #{tpu_custom_call.1} parent=15 // pred_check
          %p156 = pneg %p79
        $region22: #{tpu_custom_call.1} parent=15 // pred_check_branch
          %158 = sbr.rel (%p156) target = $region24
        $region23: #{tpu_custom_call.1} parent=15 // pred_region
          %s159 = sand.u32 %s69, 1
          %s160 = scalar_lea.sflag [#allocation6], %s159
          %s161 = sand.u32 %s69, 1
          %s162 = smul.addr %s161, 128
          %s163 = scalar_lea.vmem [#allocation5], %s162
          %s164 = smul.u32 4, %s25
          %166 = vsyncadd %s160, 0
          %s167 = smul.addr %s24, 16
          %s168 = sadd.s32 %s164, %s167
          %s169 = smul.addr %s168, 8
          %s170 = scalar_lea.hbm %s1, %s169
          %s171 = sshll.u32 %s170, 4
          %s172 = int_to_ptr.hbm [resolvable:$true] %s171
          %s173 = sshll.u32 %s163, 4
          %s174 = int_to_ptr.vmem [resolvable:$true] %s173
          %179 = dma.hbm_to_vmem [thread:$0]  %s172, 2048, %s174, %s160, 128, 128, 8
        $region24: #{tpu_custom_call.1} parent=15 // pred_fallthru
          _
      $region16: #{tpu_custom_call.1} parent=5 // pred_fallthru
        _
      %p180 = scmp.le.s32.totalorder 1, %s17
      %p181 = scmp.lt.s32.totalorder %s17, 3
      %p182 = pnand %p180, %p181
      %p183 = pneg %p182
      // Predicated region
      $region25: #{tpu_custom_call.1} parent=5 // pred_check
        _
      $region26: #{tpu_custom_call.1} parent=5 // pred_check_branch
        %185 = sbr.rel (%p182) target = $region28
      $region27: #{tpu_custom_call.1} parent=5 // pred_region
        %s186 = ssub.s32 %s17, 1
        %s187 = sand.u32 %s44, 1
        %s188 = scalar_lea.sflag [#allocation3], %s187
        %s189 = sand.u32 %s44, 1
        %s190 = smul.addr %s189, 128
        %s191 = scalar_lea.vmem [#allocation2], %s190
        // Predicated region
        $region29: #{tpu_custom_call.1} parent=27 // pred_check
          %p192 = pneg %p57
        $region30: #{tpu_custom_call.1} parent=27 // pred_check_branch
          %194 = sbr.rel (%p192) target = $region32
        $region31: #{tpu_custom_call.1} parent=27 // pred_region
          %196 = dma.done %s188, 2048
        $region32: #{tpu_custom_call.1} parent=27 // pred_fallthru
          _
        %s197 = sand.u32 %s72, 1
        %s198 = scalar_lea.sflag [#allocation6], %s197
        %s199 = sand.u32 %s72, 1
        %s200 = smul.addr %s199, 128
        %s201 = scalar_lea.vmem [#allocation5], %s200
        // Predicated region
        $region33: #{tpu_custom_call.1} parent=27 // pred_check
          %p202 = pneg %p85
        $region34: #{tpu_custom_call.1} parent=27 // pred_check_branch
          %204 = sbr.rel (%p202) target = $region36
        $region35: #{tpu_custom_call.1} parent=27 // pred_region
          %206 = dma.done %s198, 2048
        $region36: #{tpu_custom_call.1} parent=27 // pred_fallthru
          _
        %s207 = sand.u32 %s44, 1
        %s208 = scalar_lea.sflag [#allocation3], %s207
        %s209 = sand.u32 %s44, 1
        %s210 = smul.addr %s209, 128
        %s211 = scalar_lea.vmem [#allocation2], %s210
        %p212 = pneg %p57
        %p213 = pneg %p54
        %s214 = sand.u32 %s72, 1
        %s215 = scalar_lea.sflag [#allocation6], %s214
        %s216 = sand.u32 %s72, 1
        %s217 = smul.addr %s216, 128
        %s218 = scalar_lea.vmem [#allocation5], %s217
        %p219 = pneg %p85
        %p220 = pneg %p82
        %p221 = pneg %p113
        %p222 = pneg %p110
        %s223 = sand.u32 %s100, 1
        %s224 = scalar_lea.sflag [#allocation4], %s223
        %s225 = sand.u32 %s100, 1
        %s226 = smul.addr %s225, 8
        %s227 = scalar_lea.vmem [#allocation7], %s226
        %s228 = smul.u32 4, %s27
        %s229 = smul.u32 4, %s27
        %v230 = vld [vmem:[%s191] sm:$0xff]
        %v231 = vld [vmem:[%s191 + $0x8] sm:$0xff]
        %v232 = vld [vmem:[%s191 + $0x10] sm:$0xff]
        %v233 = vld [vmem:[%s191 + $0x18] sm:$0xff]
        %v234 = vld [vmem:[%s191 + $0x20] sm:$0xff]
        %v235 = vld [vmem:[%s191 + $0x28] sm:$0xff]
        %v236 = vld [vmem:[%s191 + $0x30] sm:$0xff]
        %v237 = vld [vmem:[%s191 + $0x38] sm:$0xff]
        %v238 = vld [vmem:[%s191 + $0x40] sm:$0xff]
        %v239 = vld [vmem:[%s191 + $0x48] sm:$0xff]
        %v240 = vld [vmem:[%s191 + $0x50] sm:$0xff]
        %v241 = vld [vmem:[%s191 + $0x58] sm:$0xff]
        %v242 = vld [vmem:[%s191 + $0x60] sm:$0xff]
        %v243 = vld [vmem:[%s191 + $0x68] sm:$0xff]
        %v244 = vld [vmem:[%s191 + $0x70] sm:$0xff]
        %v245 = vld [vmem:[%s191 + $0x78] sm:$0xff]
        %v246 = vld [vmem:[%s201] sm:$0xff]
        %v247 = vld [vmem:[%s201 + $0x8] sm:$0xff]
        %v248 = vld [vmem:[%s201 + $0x10] sm:$0xff]
        %v249 = vld [vmem:[%s201 + $0x18] sm:$0xff]
        %v250 = vld [vmem:[%s201 + $0x20] sm:$0xff]
        %v251 = vld [vmem:[%s201 + $0x28] sm:$0xff]
        %v252 = vld [vmem:[%s201 + $0x30] sm:$0xff]
        %v253 = vld [vmem:[%s201 + $0x38] sm:$0xff]
        %v254 = vld [vmem:[%s201 + $0x40] sm:$0xff]
        %v255 = vld [vmem:[%s201 + $0x48] sm:$0xff]
        %v256 = vld [vmem:[%s201 + $0x50] sm:$0xff]
        %v257 = vld [vmem:[%s201 + $0x58] sm:$0xff]
        %v258 = vld [vmem:[%s201 + $0x60] sm:$0xff]
        %v259 = vld [vmem:[%s201 + $0x68] sm:$0xff]
        %v260 = vld [vmem:[%s201 + $0x70] sm:$0xff]
        %v261 = vld [vmem:[%s201 + $0x78] sm:$0xff]
        %v262 = vmax.f32 %v230, %v234
        %v263 = vmax.f32 %v262, %v238
        %v264 = vmax.f32 %v263, %v242
        %v265 = vmax.f32 %v231, %v235
        %v266 = vmax.f32 %v265, %v239
        %v267 = vmax.f32 %v266, %v243
        %v268 = vmax.f32 %v232, %v236
        %v269 = vmax.f32 %v268, %v240
        %v270 = vmax.f32 %v269, %v244
        %v271 = vmax.f32 %v233, %v237
        %v272 = vmax.f32 %v271, %v241
        %v273 = vmax.f32 %v272, %v245
        %v274 = vsub.f32 %v230, %v264
        %v275 = vsub.f32 %v231, %v267
        %v276 = vsub.f32 %v232, %v270
        %v277 = vsub.f32 %v233, %v273
        %v278 = vsub.f32 %v234, %v264
        %v279 = vsub.f32 %v235, %v267
        %v280 = vsub.f32 %v236, %v270
        %v281 = vsub.f32 %v237, %v273
        %v282 = vsub.f32 %v238, %v264
        %v283 = vsub.f32 %v239, %v267
        %v284 = vsub.f32 %v240, %v270
        %v285 = vsub.f32 %v241, %v273
        %v286 = vsub.f32 %v242, %v264
        %v287 = vsub.f32 %v243, %v267
        %v288 = vsub.f32 %v244, %v270
        %v289 = vsub.f32 %v245, %v273
        %v290 = vmul.f32 %v274, 1.442695
        %v291 = vpow.pop %v290
        %v292 = vmul.f32 %v275, 1.442695
        %v293 = vpow.pop %v292
        %v294 = vmul.f32 %v276, 1.442695
        %v295 = vpow.pop %v294
        %v296 = vmul.f32 %v277, 1.442695
        %v297 = vpow.pop %v296
        %v298 = vmul.f32 %v278, 1.442695
        %v299 = vpow.pop %v298
        %v300 = vmul.f32 %v279, 1.442695
        %v301 = vpow.pop %v300
        %v302 = vmul.f32 %v280, 1.442695
        %v303 = vpow.pop %v302
        %v304 = vmul.f32 %v281, 1.442695
        %v305 = vpow.pop %v304
        %v306 = vmul.f32 %v282, 1.442695
        %v307 = vpow.pop %v306
        %v308 = vmul.f32 %v283, 1.442695
        %v309 = vpow.pop %v308
        %v310 = vmul.f32 %v284, 1.442695
        %v311 = vpow.pop %v310
        %v312 = vmul.f32 %v285, 1.442695
        %v313 = vpow.pop %v312
        %v314 = vmul.f32 %v286, 1.442695
        %v315 = vpow.pop %v314
        %v316 = vmul.f32 %v287, 1.442695
        %v317 = vpow.pop %v316
        %v318 = vmul.f32 %v288, 1.442695
        %v319 = vpow.pop %v318
        %v320 = vmul.f32 %v289, 1.442695
        %v321 = vpow.pop %v320
        %v322 = vmax.f32 %v246, %v250
        %v323 = vmax.f32 %v322, %v254
        %v324 = vmax.f32 %v323, %v258
        %v325 = vmax.f32 %v247, %v251
        %v326 = vmax.f32 %v325, %v255
        %v327 = vmax.f32 %v326, %v259
        %v328 = vmax.f32 %v248, %v252
        %v329 = vmax.f32 %v328, %v256
        %v330 = vmax.f32 %v329, %v260
        %v331 = vmax.f32 %v249, %v253
        %v332 = vmax.f32 %v331, %v257
        %v333 = vmax.f32 %v332, %v261
        %v334 = vsub.f32 %v246, %v324
        %v335 = vsub.f32 %v247, %v327
        %v336 = vsub.f32 %v248, %v330
        %v337 = vsub.f32 %v249, %v333
        %v338 = vsub.f32 %v250, %v324
        %v339 = vsub.f32 %v251, %v327
        %v340 = vsub.f32 %v252, %v330
        %v341 = vsub.f32 %v253, %v333
        %v342 = vsub.f32 %v254, %v324
        %v343 = vsub.f32 %v255, %v327
        %v344 = vsub.f32 %v256, %v330
        %v345 = vsub.f32 %v257, %v333
        %v346 = vsub.f32 %v258, %v324
        %v347 = vsub.f32 %v259, %v327
        %v348 = vsub.f32 %v260, %v330
        %v349 = vsub.f32 %v261, %v333
        %v350 = vmul.f32 %v334, 1.442695
        %v351 = vpow.pop %v350
        %v352 = vmul.f32 %v335, 1.442695
        %v353 = vpow.pop %v352
        %v354 = vmul.f32 %v336, 1.442695
        %v355 = vpow.pop %v354
        %v356 = vmul.f32 %v337, 1.442695
        %v357 = vpow.pop %v356
        %v358 = vmul.f32 %v338, 1.442695
        %v359 = vpow.pop %v358
        %v360 = vmul.f32 %v339, 1.442695
        %v361 = vpow.pop %v360
        %v362 = vmul.f32 %v340, 1.442695
        %v363 = vpow.pop %v362
        %v364 = vmul.f32 %v341, 1.442695
        %v365 = vpow.pop %v364
        %v366 = vmul.f32 %v342, 1.442695
        %v367 = vpow.pop %v366
        %v368 = vmul.f32 %v343, 1.442695
        %v369 = vpow.pop %v368
        %v370 = vmul.f32 %v344, 1.442695
        %v371 = vpow.pop %v370
        %v372 = vmul.f32 %v345, 1.442695
        %v373 = vpow.pop %v372
        %v374 = vmul.f32 %v346, 1.442695
        %v375 = vpow.pop %v374
        %v376 = vmul.f32 %v347, 1.442695
        %v377 = vpow.pop %v376
        %v378 = vmul.f32 %v348, 1.442695
        %v379 = vpow.pop %v378
        %v380 = vmul.f32 %v349, 1.442695
        %v381 = vpow.pop %v380
        %v382 = vadd.f32 %v291, %v299
        %v383 = vadd.f32 %v382, %v307
        %v384 = vadd.f32 %v383, %v315
        %v385 = vadd.f32 %v293, %v301
        %v386 = vadd.f32 %v385, %v309
        %v387 = vadd.f32 %v386, %v317
        %v388 = vadd.f32 %v295, %v303
        %v389 = vadd.f32 %v388, %v311
        %v390 = vadd.f32 %v389, %v319
        %v391 = vadd.f32 %v297, %v305
        %v392 = vadd.f32 %v391, %v313
        %v393 = vadd.f32 %v392, %v321
        %v394 = vadd.f32 %v351, %v359
        %v395 = vadd.f32 %v394, %v367
        %v396 = vadd.f32 %v395, %v375
        %v397 = vadd.f32 %v353, %v361
        %v398 = vadd.f32 %v397, %v369
        %v399 = vadd.f32 %v398, %v377
        %v400 = vadd.f32 %v355, %v363
        %v401 = vadd.f32 %v400, %v371
        %v402 = vadd.f32 %v401, %v379
        %v403 = vadd.f32 %v357, %v365
        %v404 = vadd.f32 %v403, %v373
        %v405 = vadd.f32 %v404, %v381
        %v406 = vrcp.pop %v384
        %v407 = vrcp.pop %v387
        %v408 = vrcp.pop %v390
        %v409 = vrcp.pop %v393
        %v410 = vrcp.pop %v396
        %v411 = vrcp.pop %v399
        %v412 = vrcp.pop %v402
        %v413 = vrcp.pop %v405
        %v414 = vmul.f32 %v384, %v406
        %v415 = vmul.f32 %v387, %v407
        %v416 = vmul.f32 %v390, %v408
        %v417 = vmul.f32 %v393, %v409
        %v418 = vsub.f32 2.0, %v414
        %v419 = vsub.f32 2.0, %v415
        %v420 = vsub.f32 2.0, %v416
        %v421 = vsub.f32 2.0, %v417
        %v422 = vmul.f32 %v406, %v418
        %v423 = vmul.f32 %v407, %v419
        %v424 = vmul.f32 %v408, %v420
        %v425 = vmul.f32 %v409, %v421
        %v426 = vmul.f32 %v396, %v410
        %v427 = vmul.f32 %v399, %v411
        %v428 = vmul.f32 %v402, %v412
        %v429 = vmul.f32 %v405, %v413
        %v430 = vsub.f32 2.0, %v426
        %v431 = vsub.f32 2.0, %v427
        %v432 = vsub.f32 2.0, %v428
        %v433 = vsub.f32 2.0, %v429
        %v434 = vmul.f32 %v410, %v430
        %v435 = vmul.f32 %v411, %v431
        %v436 = vmul.f32 %v412, %v432
        %v437 = vmul.f32 %v413, %v433
        %v438 = vmul.f32 %v291, %v422
        %v439 = vmul.f32 %v293, %v423
        %v440 = vmul.f32 %v295, %v424
        %v441 = vmul.f32 %v297, %v425
        %v442 = vmul.f32 %v299, %v422
        %v443 = vmul.f32 %v301, %v423
        %v444 = vmul.f32 %v303, %v424
        %v445 = vmul.f32 %v305, %v425
        %v446 = vmul.f32 %v307, %v422
        %v447 = vmul.f32 %v309, %v423
        %v448 = vmul.f32 %v311, %v424
        %v449 = vmul.f32 %v313, %v425
        %v450 = vmul.f32 %v315, %v422
        %v451 = vmul.f32 %v317, %v423
        %v452 = vmul.f32 %v319, %v424
        %v453 = vmul.f32 %v321, %v425
        %v454 = vmul.f32 %v351, %v434
        %v455 = vmul.f32 %v353, %v435
        %v456 = vmul.f32 %v355, %v436
        %v457 = vmul.f32 %v357, %v437
        %v458 = vmul.f32 %v359, %v434
        %v459 = vmul.f32 %v361, %v435
        %v460 = vmul.f32 %v363, %v436
        %v461 = vmul.f32 %v365, %v437
        %v462 = vmul.f32 %v367, %v434
        %v463 = vmul.f32 %v369, %v435
        %v464 = vmul.f32 %v371, %v436
        %v465 = vmul.f32 %v373, %v437
        %v466 = vmul.f32 %v375, %v434
        %v467 = vmul.f32 %v377, %v435
        %v468 = vmul.f32 %v379, %v436
        %v469 = vmul.f32 %v381, %v437
        %v470 = vsub.f32 %v438, %v454
        %v471 = vsub.f32 %v439, %v455
        %v472 = vsub.f32 %v440, %v456
        %v473 = vsub.f32 %v441, %v457
        %v474 = vsub.f32 %v442, %v458
        %v475 = vsub.f32 %v443, %v459
        %v476 = vsub.f32 %v444, %v460
        %v477 = vsub.f32 %v445, %v461
        %v478 = vsub.f32 %v446, %v462
        %v479 = vsub.f32 %v447, %v463
        %v480 = vsub.f32 %v448, %v464
        %v481 = vsub.f32 %v449, %v465
        %v482 = vsub.f32 %v450, %v466
        %v483 = vsub.f32 %v451, %v467
        %v484 = vsub.f32 %v452, %v468
        %v485 = vsub.f32 %v453, %v469
        %v486 = vmul.f32 %v470, %v470
        %v487 = vmul.f32 %v471, %v471
        %v488 = vmul.f32 %v472, %v472
        %v489 = vmul.f32 %v473, %v473
        %v490 = vmul.f32 %v474, %v474
        %v491 = vmul.f32 %v475, %v475
        %v492 = vmul.f32 %v476, %v476
        %v493 = vmul.f32 %v477, %v477
        %v494 = vmul.f32 %v478, %v478
        %v495 = vmul.f32 %v479, %v479
        %v496 = vmul.f32 %v480, %v480
        %v497 = vmul.f32 %v481, %v481
        %v498 = vmul.f32 %v482, %v482
        %v499 = vmul.f32 %v483, %v483
        %v500 = vmul.f32 %v484, %v484
        %v501 = vmul.f32 %v485, %v485
        %v502 = vadd.f32 %v486, %v490
        %v503 = vadd.f32 %v502, %v494
        %v504 = vadd.f32 %v503, %v498
        %v505 = vadd.f32 %v487, %v491
        %v506 = vadd.f32 %v505, %v495
        %v507 = vadd.f32 %v506, %v499
        %v508 = vadd.f32 %v488, %v492
        %v509 = vadd.f32 %v508, %v496
        %v510 = vadd.f32 %v509, %v500
        %v511 = vadd.f32 %v489, %v493
        %v512 = vadd.f32 %v511, %v497
        %v513 = vadd.f32 %v512, %v501
        %vm514 = vcmp.lt.f32.partialorder %v396, 1.0326555
        %vm515 = vcmp.lt.f32.partialorder %v399, 1.0326555
        %vm516 = vcmp.lt.f32.partialorder %v402, 1.0326555
        %vm517 = vcmp.lt.f32.partialorder %v405, 1.0326555
        %v518 = vsel %vm514, %v504, 0.0
        %v519 = vsel %vm515, %v507, 0.0
        %v520 = vsel %vm516, %v510, 0.0
        %v521 = vsel %vm517, %v513, 0.0
        %v522 = vadd.f32 %v518, %v519
        %v523 = vadd.f32 %v522, %v520
        %v524 = vadd.f32 %v523, %v521
        %525 = vadd.xlane.f32.xlu0 %v524
        %v526 = vpop.xlane.xlu0 %525
        %v527 = vrot.slane %v526, 4
        %v528 = vadd.f32 %v526, %v527
        %v529 = vrot.slane %v528, 2
        %v530 = vadd.f32 %v528, %v529
        %v531 = vrot.slane %v530, 1
        %v532 = vadd.f32 %v530, %v531
        %s533 = vtos %v532
        %v534 = vsel %vm514, 1, 0
        %v535 = vsel %vm515, 1, 0
        %v536 = vsel %vm516, 1, 0
        %v537 = vsel %vm517, 1, 0
        %v538 = vcvt.s32.f32 %v534
        %v539 = vcvt.s32.f32 %v535
        %v540 = vcvt.s32.f32 %v536
        %v541 = vcvt.s32.f32 %v537
        %v542 = vadd.f32 %v538, %v539
        %v543 = vadd.f32 %v542, %v540
        %v544 = vadd.f32 %v543, %v541
        %545 = vadd.xlane.f32.xlu0 %v544
        %v546 = vpop.xlane.xlu0 %545
        %v547 = vrot.slane %v546, 4
        %v548 = vadd.f32 %v546, %v547
        %v549 = vrot.slane %v548, 2
        %v550 = vadd.f32 %v548, %v549
        %v551 = vrot.slane %v550, 1
        %v552 = vadd.f32 %v550, %v551
        %s553 = vtos %v552
        %v554 = vlaneseq
        %v555 = vshrl.u32 %v554, 7
        %vm556 = vcmp.eq.s32.totalorder %v555, 0
        %vm557 = vcmp.eq.s32.totalorder %v555, 1
        %v558 = vstv %s553
        %v559 = vsel %vm557, %v558, 0.0
        %v560 = vstv %s533
        %v561 = vsel %vm556, %v560, %v559
        %562 = vst [vmem:[%s227] sm:$0xff] %v561
        %s563 = sand.u32 %s100, 1
        %s564 = scalar_lea.sflag [#allocation4], %s563
        %s565 = sand.u32 %s100, 1
        %s566 = smul.addr %s565, 8
        %s567 = scalar_lea.vmem [#allocation7], %s566
        // Predicated region
        $region37: #{tpu_custom_call.1} parent=27 // pred_check
          %p568 = pneg %p110
        $region38: #{tpu_custom_call.1} parent=27 // pred_check_branch
          %570 = sbr.rel (%p568) target = $region40
        $region39: #{tpu_custom_call.1} parent=27 // pred_region
          %572 = vsyncadd %s564, 0
          %s573 = sadd.s32 %s27, %s26
          %s574 = smul.addr %s573, 8
          %s575 = scalar_lea.hbm %s2, %s574
          %s577 = sshll.u32 %s567, 4
          %s578 = int_to_ptr.vmem [resolvable:$true] %s577
          %s579 = sshll.u32 %s575, 4
          %s580 = int_to_ptr.hbm [resolvable:$true] %s579
          %582 = dma.vmem_to_hbm [thread:$0]  %s578, 128, %s580, %s564
        $region40: #{tpu_custom_call.1} parent=27 // pred_fallthru
          _
      $region28: #{tpu_custom_call.1} parent=5 // pred_fallthru
        _
      %p583 = scmp.le.s32.totalorder 2, %s17
      // Predicated region
      $region41: #{tpu_custom_call.1} parent=5 // pred_check
        %p584 = pneg %p583
      $region42: #{tpu_custom_call.1} parent=5 // pred_check_branch
        %586 = sbr.rel (%p584) target = $region44
      $region43: #{tpu_custom_call.1} parent=5 // pred_region
        %s587 = ssub.s32 %s17, 2
        // Predicated region
        $region45: #{tpu_custom_call.1} parent=43 // pred_check
          %p588 = pneg %p116
        $region46: #{tpu_custom_call.1} parent=43 // pred_check_branch
          %590 = sbr.rel (%p588) target = $region48
        $region47: #{tpu_custom_call.1} parent=43 // pred_region
          %s591 = sand.u32 %s101, 1
          %s592 = scalar_lea.sflag [#allocation4], %s591
          %s593 = sand.u32 %s101, 1
          %s594 = smul.addr %s593, 8
          %s595 = scalar_lea.vmem [#allocation7], %s594
          %597 = dma.done %s592, 128
        $region48: #{tpu_custom_call.1} parent=43 // pred_fallthru
          _
      $region44: #{tpu_custom_call.1} parent=5 // pred_fallthru
        _
    $region6: #{tpu_custom_call.1} parent=1 // loop_footer
      %s21 = sadd.s32 1, %s17
    $region7: #{tpu_custom_call.1} parent=1 // loop_footer_branch
      %16 = sbr.rel target = $region3
    $region8: #{tpu_custom_call.1} parent=1 // loop_exit
      _
    %598 = vsyncpa [#allocation3], 1
    %s599 = scalar_lea.sflag [#allocation3], 1
    %600 = vsyncpa %s599, 1
    %601 = vsyncpa [#allocation6], 1
    %s602 = scalar_lea.sflag [#allocation6], 1
    %603 = vsyncpa %s602, 1
    %604 = vsyncpa [#allocation4], 1
    %s605 = scalar_lea.sflag [#allocation4], 1
    %606 = vsyncpa %s605, 1

</llo_original>
